<compile_context>
chip_gen: v6e
topology: v6e:2x2x1
jax: 0.10.0
libtpu: 0.0.40
codegen_flags: <defaults>
</compile_context>

<pallas_src>
import jax
import jax.numpy as jnp
from jax.experimental import pallas as pl
from jax.experimental.pallas import tpu as pltpu

# ----- synthetic config (small shapes consistent with the module) -----
BYT5_VOCAB = 64
BYT5_HIDDEN = 32          # byt5_hidden_size (logical)
LLAMA_VOCAB = 128
LLAMA_HIDDEN = 64         # llama_hidden_size (logical)
NUM_VIRTUAL_TOKENS = 4

# Padded (lane-aligned) physical sizes used by the kernel.
VB_PAD = 128              # byte vocab rows, padded
HB_PAD = 128              # byt5 hidden, padded
HL_PAD = 128              # llama hidden, padded

_VMEM = pl.BlockSpec(memory_space=pltpu.MemorySpace.VMEM)


# ------------------------------ fused Pallas kernel ---------------------------

def fused_forward_kernel(byte_ids_ref, byte_mask_ref, byt5_ref,
                         bridge_w_ref, bridge_b_ref,
                         llama_ids_ref, llama_ref,
                         out_ref):
    """One launch for the whole hot path.

    Byte path:
        masked mean pool of byte embeddings (mask-weighted one-hot counts @
        byte table, divided by the count sum) fused with the bridging Linear.
    Llama path:
        token-embedding lookup for prompt+explanation ids as one bf16 one-hot
        MXU matmul.
    Both results are written directly into the combined [B, NV+St, 128] bf16
    output slab (final inputs_embeds, lane-padded).
    """
    f32 = jnp.float32
    bf16 = jnp.bfloat16

    B, T, Hl = out_ref.shape            # Hl == HL_PAD == 128 (lane dense)
    NV = NUM_VIRTUAL_TOKENS
    St = T - NV
    NB = byte_ids_ref.shape[0]          # B * Sb
    Sb = NB // B
    Vb = byt5_ref.shape[0]              # padded byte vocab (128)
    Vl = llama_ref.shape[0]             # llama vocab (128)

    # ---- byte path: mask-weighted one-hot counts over the (padded) byte vocab
    vb_iota = jax.lax.broadcasted_iota(jnp.int32, (1, Vb), 1)
    b_onehot = (byte_ids_ref[...] == vb_iota).astype(f32) * byte_mask_ref[...]   # [B*Sb, Vb]
    counts = jnp.sum(b_onehot.reshape(B, Sb, Vb), axis=1)                         # [B, Vb]
    # Each valid byte contributes exactly one count -> denom == mask sum.
    denom = jnp.maximum(jnp.sum(counts, axis=1, keepdims=True), 1e-9)             # [B, 1]

    # pooled == masked mean of byte embeddings (counts are exact small ints,
    # so the bf16 cast is lossless; only the table itself is bf16-rounded).
    pooled_sum = jnp.dot(counts.astype(bf16), byt5_ref[...],
                         preferred_element_type=f32)                              # [B, Hb]
    pooled = pooled_sum / denom                                                   # exact divide

    # EmbeddingBridging: Linear(byt5_hidden -> num_virtual_tokens * llama_hidden)
    bridged = (jnp.dot(pooled.astype(bf16), bridge_w_ref[...],
                       preferred_element_type=f32)
               + bridge_b_ref[...])                                               # [B, NV*Hl] f32

    # Write the NV virtual tokens into rows [:NV] (static, 128-aligned slices).
    for v in range(NV):
        tok = bridged[:, v * Hl:(v + 1) * Hl].astype(out_ref.dtype)               # [B, Hl]
        out_ref[:, v:v + 1, :] = tok[:, None, :]

    # ---- llama token embeddings (prompt + explanation in one gather) ----
    vl_iota = jax.lax.broadcasted_iota(jnp.int32, (1, Vl), 1)
    l_onehot = (llama_ids_ref[...] == vl_iota).astype(bf16)                       # [B*St, Vl]
    emb = jnp.dot(l_onehot, llama_ref[...], preferred_element_type=f32)           # [B*St, Hl]
    out_ref[:, NV:, :] = emb.reshape(B, St, Hl).astype(out_ref.dtype)


def fused_forward(params, byte_ids_flat, byte_mask_flat, llama_ids_flat,
                  batch, total_tokens):
    out_shape = jax.ShapeDtypeStruct((batch, total_tokens, HL_PAD), jnp.bfloat16)
    return pl.pallas_call(
        fused_forward_kernel,
        out_shape=out_shape,
        in_specs=[_VMEM] * 7,
        out_specs=_VMEM,
    )(byte_ids_flat, byte_mask_flat, params["byt5_embed"],
      params["bridge_w"], params["bridge_b"],
      llama_ids_flat, params["llama_embed"])


# ------------------------------ parameters ----------------------------------

def init_params(key):
    k1, k2, k3, k4 = jax.random.split(key, 4)

    # ByT5 shared byte embedding (stand-in for the encoder output), bf16,
    # zero-padded to [VB_PAD, HB_PAD] so the matmul is 128-aligned.
    byt5 = 0.02 * jax.random.normal(k1, (BYT5_VOCAB, BYT5_HIDDEN), jnp.float32)
    byt5_embed = (jnp.zeros((VB_PAD, HB_PAD), jnp.float32)
                  .at[:BYT5_VOCAB, :BYT5_HIDDEN].set(byt5)).astype(jnp.bfloat16)

    # Llama input-embedding table (token_embedder), bf16, hidden padded to 128.
    llama = 0.02 * jax.random.normal(k2, (LLAMA_VOCAB, LLAMA_HIDDEN), jnp.float32)
    llama_embed = (jnp.zeros((LLAMA_VOCAB, HL_PAD), jnp.float32)
                   .at[:, :LLAMA_HIDDEN].set(llama)).astype(jnp.bfloat16)

    # EmbeddingBridging: Linear(byt5_hidden, num_virtual_tokens * llama_hidden).
    # Padded per virtual token so each token occupies a 128-wide lane block.
    w = 0.02 * jax.random.normal(
        k3, (BYT5_HIDDEN, NUM_VIRTUAL_TOKENS, LLAMA_HIDDEN), jnp.float32)
    w_pad = (jnp.zeros((HB_PAD, NUM_VIRTUAL_TOKENS, HL_PAD), jnp.float32)
             .at[:BYT5_HIDDEN, :, :LLAMA_HIDDEN].set(w))
    bridge_w = w_pad.reshape(HB_PAD, NUM_VIRTUAL_TOKENS * HL_PAD).astype(jnp.bfloat16)

    b = 0.02 * jax.random.normal(k4, (NUM_VIRTUAL_TOKENS, LLAMA_HIDDEN), jnp.float32)
    b_pad = (jnp.zeros((NUM_VIRTUAL_TOKENS, HL_PAD), jnp.float32)
             .at[:, :LLAMA_HIDDEN].set(b))
    bridge_b = b_pad.reshape(1, NUM_VIRTUAL_TOKENS * HL_PAD)        # f32 bias

    return {
        "byt5_embed": byt5_embed,
        "llama_embed": llama_embed,
        "bridge_w": bridge_w,
        "bridge_b": bridge_b,
    }


# ------------------------------ forward -------------------------------------

def full_multimodal_forward(params,
                            byte_input_ids, byte_attention_mask,
                            prompt_input_ids, prompt_attention_mask,
                            explanation_input_ids, explanation_attention_mask,
                            labels=None):
    B, Sb = byte_input_ids.shape
    Sp = prompt_input_ids.shape[1]
    Se = explanation_input_ids.shape[1]
    St = Sp + Se
    T = NUM_VIRTUAL_TOKENS + St

    # Tiny integer/float reshapes for the fused kernel (XLA glue, fuses away).
    byte_ids_flat = byte_input_ids.reshape(B * Sb, 1).astype(jnp.int32)
    byte_mask_flat = byte_attention_mask.reshape(B * Sb, 1).astype(jnp.float32)
    llama_ids = jnp.concatenate([prompt_input_ids, explanation_input_ids], axis=1)
    llama_ids_flat = llama_ids.reshape(B * St, 1).astype(jnp.int32)

    # --- single fused Pallas launch writes the combined inputs_embeds slab ---
    combined = fused_forward(params, byte_ids_flat, byte_mask_flat,
                             llama_ids_flat, B, T)          # [B, T, 128] bf16

    # Drop the lane padding and apply the module's .half() cast.
    combined_embeds = combined[:, :, :LLAMA_HIDDEN].astype(jnp.float16)

    bridging_attention = jnp.ones((B, NUM_VIRTUAL_TOKENS),
                                  dtype=prompt_attention_mask.dtype)
    combined_attention_mask = jnp.concatenate(
        [bridging_attention, prompt_attention_mask, explanation_attention_mask], axis=1)

    if labels is not None:
        pad_len = NUM_VIRTUAL_TOKENS + Sp
        pad = jnp.full((labels.shape[0], pad_len), -100, dtype=labels.dtype)
        labels = jnp.concatenate([pad, labels], axis=1)

    # TODO(synk): 8-bit pretrained Llama causal-LM forward has no Pallas
    # equivalent here; return the exact tensors that would be fed into it.
    return {
        "inputs_embeds": combined_embeds,
        "attention_mask": combined_attention_mask,
        "labels": labels,
    }


# ------------------------------ main -----------------------------------------

if __name__ == "__main__":
    key = jax.random.PRNGKey(0)
    pkey, k_b, k_p, k_e, k_l = jax.random.split(key, 5)
    params = init_params(pkey)

    B = 2
    BYTE_SEQ, PROMPT_SEQ, EXPL_SEQ = 8, 8, 8

    byte_input_ids = jax.random.randint(k_b, (B, BYTE_SEQ), 0, BYT5_VOCAB, jnp.int32)
    # mask: first row fully valid, second row has trailing padding
    byte_attention_mask = (jnp.arange(BYTE_SEQ)[None, :] <
                           jnp.array([[BYTE_SEQ], [BYTE_SEQ - 3]])).astype(jnp.int32)

    prompt_input_ids = jax.random.randint(k_p, (B, PROMPT_SEQ), 0, LLAMA_VOCAB, jnp.int32)
    prompt_attention_mask = (jnp.arange(PROMPT_SEQ)[None, :] <
                             jnp.array([[PROMPT_SEQ], [PROMPT_SEQ - 2]])).astype(jnp.int32)

    explanation_input_ids = jax.random.randint(k_e, (B, EXPL_SEQ), 0, LLAMA_VOCAB, jnp.int32)
    explanation_attention_mask = (jnp.arange(EXPL_SEQ)[None, :] <
                                  jnp.array([[EXPL_SEQ - 1], [EXPL_SEQ]])).astype(jnp.int32)

    labels = jax.random.randint(k_l, (B, EXPL_SEQ), 0, LLAMA_VOCAB, jnp.int32)

    fwd = jax.jit(full_multimodal_forward)
    out = fwd(
        params,
        byte_input_ids, byte_attention_mask,
        prompt_input_ids, prompt_attention_mask,
        explanation_input_ids, explanation_attention_mask,
        labels=labels,
    )

    jax.block_until_ready(out["inputs_embeds"])
    jax.block_until_ready(out["attention_mask"])
    jax.block_until_ready(out["labels"])

    T = NUM_VIRTUAL_TOKENS + PROMPT_SEQ + EXPL_SEQ
    assert out["inputs_embeds"].shape == (B, T, LLAMA_HIDDEN)
    assert out["inputs_embeds"].dtype == jnp.float16
    assert out["attention_mask"].shape == (B, T)
    assert out["labels"].shape == (B, T)

    print("KERNEL_OK")
</pallas_src>

<mosaic_0001>
module attributes {stable_mosaic.version = 11 : i64} {
  func.func @fused_forward_kernel(%arg0: memref<16x1xi32, #tpu.memory_space<vmem>>, %arg1: memref<16x1xf32, #tpu.memory_space<vmem>>, %arg2: memref<128x128xbf16, #tpu.memory_space<vmem>>, %arg3: memref<128x512xbf16, #tpu.memory_space<vmem>>, %arg4: memref<1x512xf32, #tpu.memory_space<vmem>>, %arg5: memref<32x1xi32, #tpu.memory_space<vmem>>, %arg6: memref<128x128xbf16, #tpu.memory_space<vmem>>, %arg7: memref<2x20x128xbf16, #tpu.memory_space<vmem>>) attributes {dimension_semantics = [], scalar_prefetch = 0 : i64, scratch_operands = 0 : i64, tpu.core_type = #tpu.core_type<tc>} {
    %0 = tpu.iota {dimensions = array<i32: 1>} : vector<1x128xi32>
    %c0 = arith.constant 0 : index
    %c0_0 = arith.constant 0 : index
    %1 = vector.load %arg0[%c0, %c0_0] : memref<16x1xi32, #tpu.memory_space<vmem>>, vector<16x1xi32>
    %2 = vector.broadcast %1 : vector<16x1xi32> to vector<16x128xi32>
    %3 = vector.broadcast %0 : vector<1x128xi32> to vector<16x128xi32>
    %4 = arith.cmpi eq, %2, %3 : vector<16x128xi32>
    %5 = arith.extui %4 : vector<16x128xi1> to vector<16x128xi32>
    %6 = arith.sitofp %5 : vector<16x128xi32> to vector<16x128xf32>
    %c0_1 = arith.constant 0 : index
    %c0_2 = arith.constant 0 : index
    %7 = vector.load %arg1[%c0_1, %c0_2] : memref<16x1xf32, #tpu.memory_space<vmem>>, vector<16x1xf32>
    %8 = vector.broadcast %7 : vector<16x1xf32> to vector<16x128xf32>
    %9 = arith.mulf %6, %8 : vector<16x128xf32>
    %10 = vector.shape_cast %9 : vector<16x128xf32> to vector<2x8x128xf32>
    %cst = arith.constant dense<0.000000e+00> : vector<2x128xf32>
    %11 = vector.multi_reduction <add>, %10, %cst [1] : vector<2x8x128xf32> to vector<2x128xf32>
    %cst_3 = arith.constant dense<0.000000e+00> : vector<2xf32>
    %12 = vector.multi_reduction <add>, %11, %cst_3 [1] : vector<2x128xf32> to vector<2xf32>
    %13 = vector.shape_cast %12 : vector<2xf32> to vector<2x1xf32>
    %cst_4 = arith.constant 9.99999971E-10 : f32
    %14 = vector.broadcast %cst_4 : f32 to vector<2x1xf32>
    %15 = arith.maximumf %13, %14 : vector<2x1xf32>
    %16 = arith.truncf %11 : vector<2x128xf32> to vector<2x128xbf16>
    %c0_5 = arith.constant 0 : index
    %c0_6 = arith.constant 0 : index
    %17 = vector.load %arg2[%c0_5, %c0_6] : memref<128x128xbf16, #tpu.memory_space<vmem>>, vector<128x128xbf16>
    %cst_7 = arith.constant dense<0.000000e+00> : vector<2x128xf32>
    %18 = tpu.matmul %16, %17, %cst_7 {dimension_numbers = #tpu.dot_dimension_numbers<[1], [0], [0], [1], [0, 0, 1, 1], [], []>} : vector<2x128xbf16>, vector<128x128xbf16>, vector<2x128xf32> -> vector<2x128xf32>
    %19 = vector.broadcast %15 : vector<2x1xf32> to vector<2x128xf32>
    %20 = arith.divf %18, %19 : vector<2x128xf32>
    %21 = arith.truncf %20 : vector<2x128xf32> to vector<2x128xbf16>
    %c0_8 = arith.constant 0 : index
    %c0_9 = arith.constant 0 : index
    %22 = vector.load %arg3[%c0_8, %c0_9] : memref<128x512xbf16, #tpu.memory_space<vmem>>, vector<128x512xbf16>
    %cst_10 = arith.constant dense<0.000000e+00> : vector<2x512xf32>
    %23 = tpu.matmul %21, %22, %cst_10 {dimension_numbers = #tpu.dot_dimension_numbers<[1], [0], [0], [1], [0, 0, 1, 1], [], []>} : vector<2x128xbf16>, vector<128x512xbf16>, vector<2x512xf32> -> vector<2x512xf32>
    %c0_11 = arith.constant 0 : index
    %c0_12 = arith.constant 0 : index
    %24 = vector.load %arg4[%c0_11, %c0_12] : memref<1x512xf32, #tpu.memory_space<vmem>>, vector<1x512xf32>
    %25 = vector.broadcast %24 : vector<1x512xf32> to vector<2x512xf32>
    %26 = arith.addf %23, %25 : vector<2x512xf32>
    %27 = vector.extract_strided_slice %26 {offsets = [0, 0], sizes = [2, 128], strides = [1, 1]} : vector<2x512xf32> to vector<2x128xf32>
    %28 = arith.truncf %27 : vector<2x128xf32> to vector<2x128xbf16>
    %29 = vector.shape_cast %28 : vector<2x128xbf16> to vector<2x1x128xbf16>
    %c0_13 = arith.constant 0 : index
    %c0_14 = arith.constant 0 : index
    %c0_15 = arith.constant 0 : index
    %30 = vector.load %arg7[%c0_13, %c0_14, %c0_15] : memref<2x20x128xbf16, #tpu.memory_space<vmem>>, vector<2x1x128xbf16>
    tpu.vector_store %arg7[%c0_13, %c0_14, %c0_15], %29 {strides = array<i32>} : memref<2x20x128xbf16, #tpu.memory_space<vmem>>, vector<2x1x128xbf16>,
    %31 = vector.extract_strided_slice %26 {offsets = [0, 128], sizes = [2, 128], strides = [1, 1]} : vector<2x512xf32> to vector<2x128xf32>
    %32 = arith.truncf %31 : vector<2x128xf32> to vector<2x128xbf16>
    %33 = vector.shape_cast %32 : vector<2x128xbf16> to vector<2x1x128xbf16>
    %c0_16 = arith.constant 0 : index
    %c1 = arith.constant 1 : index
    %c0_17 = arith.constant 0 : index
    %34 = vector.load %arg7[%c0_16, %c1, %c0_17] : memref<2x20x128xbf16, #tpu.memory_space<vmem>>, vector<2x1x128xbf16>
    tpu.vector_store %arg7[%c0_16, %c1, %c0_17], %33 {strides = array<i32>} : memref<2x20x128xbf16, #tpu.memory_space<vmem>>, vector<2x1x128xbf16>,
    %35 = vector.extract_strided_slice %26 {offsets = [0, 256], sizes = [2, 128], strides = [1, 1]} : vector<2x512xf32> to vector<2x128xf32>
    %36 = arith.truncf %35 : vector<2x128xf32> to vector<2x128xbf16>
    %37 = vector.shape_cast %36 : vector<2x128xbf16> to vector<2x1x128xbf16>
    %c0_18 = arith.constant 0 : index
    %c2 = arith.constant 2 : index
    %c0_19 = arith.constant 0 : index
    %38 = vector.load %arg7[%c0_18, %c2, %c0_19] : memref<2x20x128xbf16, #tpu.memory_space<vmem>>, vector<2x1x128xbf16>
    tpu.vector_store %arg7[%c0_18, %c2, %c0_19], %37 {strides = array<i32>} : memref<2x20x128xbf16, #tpu.memory_space<vmem>>, vector<2x1x128xbf16>,
    %39 = vector.extract_strided_slice %26 {offsets = [0, 384], sizes = [2, 128], strides = [1, 1]} : vector<2x512xf32> to vector<2x128xf32>
    %40 = arith.truncf %39 : vector<2x128xf32> to vector<2x128xbf16>
    %41 = vector.shape_cast %40 : vector<2x128xbf16> to vector<2x1x128xbf16>
    %c0_20 = arith.constant 0 : index
    %c3 = arith.constant 3 : index
    %c0_21 = arith.constant 0 : index
    %42 = vector.load %arg7[%c0_20, %c3, %c0_21] : memref<2x20x128xbf16, #tpu.memory_space<vmem>>, vector<2x1x128xbf16>
    tpu.vector_store %arg7[%c0_20, %c3, %c0_21], %41 {strides = array<i32>} : memref<2x20x128xbf16, #tpu.memory_space<vmem>>, vector<2x1x128xbf16>,
    %43 = tpu.iota {dimensions = array<i32: 1>} : vector<1x128xi32>
    %c0_22 = arith.constant 0 : index
    %c0_23 = arith.constant 0 : index
    %44 = vector.load %arg5[%c0_22, %c0_23] : memref<32x1xi32, #tpu.memory_space<vmem>>, vector<32x1xi32>
    %45 = vector.broadcast %44 : vector<32x1xi32> to vector<32x128xi32>
    %46 = vector.broadcast %43 : vector<1x128xi32> to vector<32x128xi32>
    %47 = arith.cmpi eq, %45, %46 : vector<32x128xi32>
    %48 = arith.extui %47 : vector<32x128xi1> to vector<32x128xi32>
    %49 = arith.sitofp %48 : vector<32x128xi32> to vector<32x128xf32>
    %50 = arith.truncf %49 : vector<32x128xf32> to vector<32x128xbf16>
    %c0_24 = arith.constant 0 : index
    %c0_25 = arith.constant 0 : index
    %51 = vector.load %arg6[%c0_24, %c0_25] : memref<128x128xbf16, #tpu.memory_space<vmem>>, vector<128x128xbf16>
    %cst_26 = arith.constant dense<0.000000e+00> : vector<32x128xf32>
    %52 = tpu.matmul %50, %51, %cst_26 {dimension_numbers = #tpu.dot_dimension_numbers<[1], [0], [0], [1], [0, 0, 1, 1], [], []>} : vector<32x128xbf16>, vector<128x128xbf16>, vector<32x128xf32> -> vector<32x128xf32>
    %53 = vector.shape_cast %52 : vector<32x128xf32> to vector<2x16x128xf32>
    %54 = arith.truncf %53 : vector<2x16x128xf32> to vector<2x16x128xbf16>
    %c0_27 = arith.constant 0 : index
    %c4 = arith.constant 4 : index
    %c0_28 = arith.constant 0 : index
    %55 = vector.load %arg7[%c0_27, %c4, %c0_28] : memref<2x20x128xbf16, #tpu.memory_space<vmem>>, vector<2x16x128xbf16>
    tpu.vector_store %arg7[%c0_27, %c4, %c0_28], %54 {strides = array<i32>} : memref<2x20x128xbf16, #tpu.memory_space<vmem>>, vector<2x16x128xbf16>,
    return
  }
}

</mosaic_0001>

<llo_original>
// kernel: full_multimodal_forward.1
$region0: #{full_multimodal_forward.1}
  #allocation0 [shape = 'u32[]', space=smem, size = 0x4, offset = 0x4, fixed_abs, tag = 'smem constant byte address 0x4 - core index']
  #allocation1 [shape = 'u32[144,128]{1,0:T(1,128)}', space=vmem, size = 0x12000, scoped, tag = 'internal scratch']
  %s0 = inlined_call_operand.vmem [shape: s32[16,1], index: 0, kind: input, shape index: {}]
  %s1 = inlined_call_operand.vmem [shape: f32[16,1], index: 1, kind: input, shape index: {}]
  %s2 = inlined_call_operand.vmem [shape: bf16[128,128], index: 2, kind: input, shape index: {}]
  %s3 = inlined_call_operand.hbm [shape: bf16[128,512], index: 3, kind: input, shape index: {}]
  %s4 = inlined_call_operand.vmem [shape: f32[1,512], index: 4, kind: input, shape index: {}]
  %s5 = inlined_call_operand.vmem [shape: s32[32,1], index: 5, kind: input, shape index: {}]
  %s6 = inlined_call_operand.hbm [shape: bf16[128,128], index: 6, kind: input, shape index: {}]
  %s7 = inlined_call_operand.vmem [shape: bf16[2,20,128], index: 7, kind: output, shape index: {}]
  %s8 = sld [smem:[#allocation0]]
  $region46: #{full_multimodal_forward.1} parent=0
    _
  %s10 = ssub.s32 1, %s8
  %s11 = scalar_select 0, %s10, %s8
  $region1: #{full_multimodal_forward.1} parent=0
    #allocation2 [shape = 'u8[131072]{0}', space=vmem, size = 0x20000, scoped, tag = 'input window, operand 3, single buffered']
    #allocation3 [shape = 's32[1]{0}', space=sflag, size = 0x4, scoped, tag = 'scoped memory for full_multimodal_forward.1']
    #allocation4 [shape = 'u8[32768]{0}', space=vmem, size = 0x8000, scoped, tag = 'input window, operand 6, single buffered']
    #allocation5 [shape = 's32[1]{0}', space=sflag, size = 0x4, scoped, tag = 'scoped memory for full_multimodal_forward.1']
    %12 = vsyncpa [#allocation3], 0
    %13 = vsyncpa [#allocation5], 0
    // Predicated region
    $region2: #{full_multimodal_forward.1} parent=1 // pred_check
      _
    $region3: #{full_multimodal_forward.1} parent=1 // pred_check_branch
      %15 = sbr.rel (0) target = $region5
    $region4: #{full_multimodal_forward.1} parent=1 // pred_region
      _
    $region5: #{full_multimodal_forward.1} parent=1 // pred_fallthru
      _
    // Predicated region
    $region6: #{full_multimodal_forward.1} parent=1 // pred_check
      _
    $region7: #{full_multimodal_forward.1} parent=1 // pred_check_branch
      %17 = sbr.rel (0) target = $region9
    $region8: #{full_multimodal_forward.1} parent=1 // pred_region
      _
    $region9: #{full_multimodal_forward.1} parent=1 // pred_fallthru
      _
    // Predicated region
    $region10: #{full_multimodal_forward.1} parent=1 // pred_check
      _
    $region11: #{full_multimodal_forward.1} parent=1 // pred_check_branch
      %19 = sbr.rel (0) target = $region13
    $region12: #{full_multimodal_forward.1} parent=1 // pred_region
      _
    $region13: #{full_multimodal_forward.1} parent=1 // pred_fallthru
      _
    // Predicated region
    $region14: #{full_multimodal_forward.1} parent=1 // pred_check
      _
    $region15: #{full_multimodal_forward.1} parent=1 // pred_check_branch
      %21 = sbr.rel (0) target = $region17
    $region16: #{full_multimodal_forward.1} parent=1 // pred_region
      %s23 = ssub.s32 4096, 4096
      %24 = vsyncadd [#allocation3], %s23
      %s25 = sshll.u32 [#allocation2], 4
      %s26 = int_to_ptr.vmem [resolvable:$true] %s25
      %31 = dma.hbm_to_vmem [thread:$0]  %s3, 4096, %s26, [#allocation3], 256, 256, 16
    $region17: #{full_multimodal_forward.1} parent=1 // pred_fallthru
      _
    // Predicated region
    $region18: #{full_multimodal_forward.1} parent=1 // pred_check
      _
    $region19: #{full_multimodal_forward.1} parent=1 // pred_check_branch
      %33 = sbr.rel (0) target = $region21
    $region20: #{full_multimodal_forward.1} parent=1 // pred_region
      _
    $region21: #{full_multimodal_forward.1} parent=1 // pred_fallthru
      _
    // Predicated region
    $region22: #{full_multimodal_forward.1} parent=1 // pred_check
      _
    $region23: #{full_multimodal_forward.1} parent=1 // pred_check_branch
      %35 = sbr.rel (0) target = $region25
    $region24: #{full_multimodal_forward.1} parent=1 // pred_region
      _
    $region25: #{full_multimodal_forward.1} parent=1 // pred_fallthru
      _
    // Predicated region
    $region26: #{full_multimodal_forward.1} parent=1 // pred_check
      _
    $region27: #{full_multimodal_forward.1} parent=1 // pred_check_branch
      %37 = sbr.rel (0) target = $region29
    $region28: #{full_multimodal_forward.1} parent=1 // pred_region
      %s39 = ssub.s32 1024, 1024
      %40 = vsyncadd [#allocation5], %s39
      %s41 = sshll.u32 [#allocation4], 4
      %s42 = int_to_ptr.vmem [resolvable:$true] %s41
      %47 = dma.hbm_to_vmem [thread:$0]  %s6, 1024, %s42, [#allocation5], 64, 64, 4
    $region29: #{full_multimodal_forward.1} parent=1 // pred_fallthru
      _
    // Predicated region
    $region30: #{full_multimodal_forward.1} parent=1 // pred_check
      _
    $region31: #{full_multimodal_forward.1} parent=1 // pred_check_branch
      %49 = sbr.rel (0) target = $region33
    $region32: #{full_multimodal_forward.1} parent=1 // pred_region
      %50 = dma.done [#allocation3], 4096
    $region33: #{full_multimodal_forward.1} parent=1 // pred_fallthru
      _
    // Predicated region
    $region34: #{full_multimodal_forward.1} parent=1 // pred_check
      _
    $region35: #{full_multimodal_forward.1} parent=1 // pred_check_branch
      %52 = sbr.rel (0) target = $region37
    $region36: #{full_multimodal_forward.1} parent=1 // pred_region
      %53 = dma.done [#allocation5], 1024
    $region37: #{full_multimodal_forward.1} parent=1 // pred_fallthru
      _
    %v55 = vlaneseq
    %v56 = vand.u32 %v55, 127
    %v57 = vld [vmem:[%s0] sm:$0xff]
    %v58 = vld [vmem:[%s0 + $0x8] sm:$0xff]
    %59 = vset.pattern.permute.xlu0 0
    %60 = vperm.xlu0 %59, %v57
    %v61 = vpop.permute.xlu0 %60
    %62 = vset.pattern.permute.xlu0 0
    %63 = vperm.xlu0 %62, %v58
    %v64 = vpop.permute.xlu0 %63
    %vm65 = vcmp.eq.s32.totalorder %v61, %v56
    %vm66 = vcmp.eq.s32.totalorder %v64, %v56
    %v67 = vsel %vm65, 1, 0
    %v68 = vsel %vm66, 1, 0
    %v69 = vcvt.s32.f32 %v67
    %v70 = vcvt.s32.f32 %v68
    %v71 = vld [vmem:[%s1] sm:$0xff]
    %v72 = vld [vmem:[%s1 + $0x8] sm:$0xff]
    %74 = vset.pattern.permute.xlu0 0
    %75 = vperm.xlu0 %74, %v71
    %v76 = vpop.permute.xlu0 %75
    %79 = vset.pattern.permute.xlu0 0
    %80 = vperm.xlu0 %79, %v72
    %v81 = vpop.permute.xlu0 %80
    %v83 = vmul.f32 %v69, %v76
    %v84 = vmul.f32 %v70, %v81
    %v85 = vrot.slane %v83, 4
    %v86 = vadd.f32 %v83, %v85
    %v87 = vrot.slane %v86, 2
    %v88 = vadd.f32 %v86, %v87
    %v89 = vrot.slane %v88, 1
    %v90 = vadd.f32 %v88, %v89
    %v91 = vrot.slane %v84, 4
    %v92 = vadd.f32 %v84, %v91
    %v93 = vrot.slane %v92, 2
    %v94 = vadd.f32 %v92, %v93
    %v95 = vrot.slane %v94, 1
    %v96 = vadd.f32 %v94, %v95
    %vm99 = vcmask 1041409
    %v100 = vsel %vm99, %v96, %v90
    %vm102 = vcmask 1041408
    %v103 = vsel %vm102, %v100, 0.0
    %104 = vadd.xlane.f32.xlu0 %v103
    %v105 = vpop.xlane.xlu0 %104
    %v106 = vmax.f32 %v105, 1e-09
    %v107 = vpack.c.bf16 %v90, %v90
    %v108 = vpack.c.bf16 %v96, %v96
    %v109 = vld [vmem:[%s2] sm:$0xf]
    %v110 = vld [vmem:[%s2 + $0x4] sm:$0xf]
    %v111 = vld [vmem:[%s2 + $0x8] sm:$0xf]
    %v112 = vld [vmem:[%s2 + $0xc] sm:$0xf]
    %v113 = vld [vmem:[%s2 + $0x10] sm:$0xf]
    %v114 = vld [vmem:[%s2 + $0x14] sm:$0xf]
    %v115 = vld [vmem:[%s2 + $0x18] sm:$0xf]
    %v116 = vld [vmem:[%s2 + $0x1c] sm:$0xf]
    %v117 = vld [vmem:[%s2 + $0x20] sm:$0xf]
    %v118 = vld [vmem:[%s2 + $0x24] sm:$0xf]
    %v119 = vld [vmem:[%s2 + $0x28] sm:$0xf]
    %v120 = vld [vmem:[%s2 + $0x2c] sm:$0xf]
    %v121 = vld [vmem:[%s2 + $0x30] sm:$0xf]
    %v122 = vld [vmem:[%s2 + $0x34] sm:$0xf]
    %v123 = vld [vmem:[%s2 + $0x38] sm:$0xf]
    %v124 = vld [vmem:[%s2 + $0x3c] sm:$0xf]
    %v127 = vunpack.c.l.b16 %v107
    %v128 = vunpack.c.l.b16 %v108
    %v129 = vsel %vm99, %v128, %v127
    %v130 = vpack.c.b16 %v129, %v129
    %v148 = vunpack.c.l.b16 %v109
    %v149 = vunpack.c.l.b16 %v110
    %v150 = vunpack.c.l.b16 %v111
    %v151 = vunpack.c.l.b16 %v112
    %v152 = vunpack.c.l.b16 %v113
    %v153 = vunpack.c.l.b16 %v114
    %v154 = vunpack.c.l.b16 %v115
    %v155 = vunpack.c.l.b16 %v116
    %v156 = vunpack.c.l.b16 %v117
    %v157 = vunpack.c.l.b16 %v118
    %v158 = vunpack.c.l.b16 %v119
    %v159 = vunpack.c.l.b16 %v120
    %v160 = vunpack.c.l.b16 %v121
    %v161 = vunpack.c.l.b16 %v122
    %v162 = vunpack.c.l.b16 %v123
    %v163 = vunpack.c.l.b16 %v124
    %v164 = vpack.c.b16 %v149, %v148
    %v165 = vpack.c.b16 %v151, %v150
    %v166 = vpack.c.b16 %v153, %v152
    %v167 = vpack.c.b16 %v155, %v154
    %v168 = vpack.c.b16 %v157, %v156
    %v169 = vpack.c.b16 %v159, %v158
    %v170 = vpack.c.b16 %v161, %v160
    %v171 = vpack.c.b16 %v163, %v162
    %180 = vmatprep.subr.bf16.mxu0 0
    %181 = vmatpush1.bf16.msra.mxu0 %v171
    %182 = vmatprep.subr.bf16.mxu0 0
    %183 = vmatpush1.bf16.msra.mxu0 %v170
    %184 = vmatprep.subr.bf16.mxu0 0
    %185 = vmatpush1.bf16.msra.mxu0 %v169
    %186 = vmatprep.subr.bf16.mxu0 0
    %187 = vmatpush1.bf16.msra.mxu0 %v168
    %188 = vmatprep.subr.bf16.mxu0 0
    %189 = vmatpush1.bf16.msra.mxu0 %v167
    %190 = vmatprep.subr.bf16.mxu0 0
    %191 = vmatpush1.bf16.msra.mxu0 %v166
    %192 = vmatprep.subr.bf16.mxu0 0
    %193 = vmatpush1.bf16.msra.mxu0 %v165
    %194 = vmatprep.subr.bf16.mxu0 0
    %195 = vmatpush1.bf16.msra.mxu0 %v164
    %196 = vmatprep.subr.bf16.mxu0 0
    %197 = vmatpush2.bf16.msra.mxu0 0
    %198 = vmatprep.subr.bf16.mxu0 0
    %199 = vmatpush2.bf16.msra.mxu0 0
    %200 = vmatprep.subr.bf16.mxu0 0
    %201 = vmatpush2.bf16.msra.mxu0 0
    %202 = vmatprep.subr.bf16.mxu0 0
    %203 = vmatpush2.bf16.msra.mxu0 0
    %204 = vmatprep.subr.bf16.mxu0 0
    %205 = vmatpush2.bf16.msra.mxu0 0
    %206 = vmatprep.subr.bf16.mxu0 0
    %207 = vmatpush2.bf16.msra.mxu0 0
    %208 = vmatprep.subr.bf16.mxu0 0
    %209 = vmatpush2.bf16.msra.mxu0 0
    %210 = vmatprep.subr.bf16.mxu0 0
    %211 = vmatpush2.bf16.msra.mxu0 0
    %212 = vmatprep.mubr.bf16.mxu0 0
    %213 = vmatmul.mubr.bf16.gmra.mxu0 %v130
    %v214 = vpop.f32.mrf.mxu0
    %v215 = vadd.f32 0.0, %v214
    %v216 = vpop.f32.mrf.mxu0
    %v217 = vpop.f32.mrf.mxu0
    %v218 = vpop.f32.mrf.mxu0
    %219 = vdwg.mxu0
    %v220 = vrcp.pop %v106
    %v221 = vmul.f32 %v215, %v220
    %v222 = vpack.c.bf16 %v221, %v221
    %v223 = vld [vmem:[#allocation2] sm:$0xff]
    %v224 = vld [vmem:[#allocation2 + $0x8] sm:$0xff]
    %v225 = vld [vmem:[#allocation2 + $0x10] sm:$0xff]
    %v226 = vld [vmem:[#allocation2 + $0x18] sm:$0xff]
    %v227 = vld [vmem:[#allocation2 + $0x20] sm:$0xff]
    %v228 = vld [vmem:[#allocation2 + $0x28] sm:$0xff]
    %v229 = vld [vmem:[#allocation2 + $0x30] sm:$0xff]
    %v230 = vld [vmem:[#allocation2 + $0x38] sm:$0xff]
    %v231 = vld [vmem:[#allocation2 + $0x40] sm:$0xff]
    %v232 = vld [vmem:[#allocation2 + $0x48] sm:$0xff]
    %v233 = vld [vmem:[#allocation2 + $0x50] sm:$0xff]
    %v234 = vld [vmem:[#allocation2 + $0x58] sm:$0xff]
    %v235 = vld [vmem:[#allocation2 + $0x60] sm:$0xff]
    %v236 = vld [vmem:[#allocation2 + $0x68] sm:$0xff]
    %v237 = vld [vmem:[#allocation2 + $0x70] sm:$0xff]
    %v238 = vld [vmem:[#allocation2 + $0x78] sm:$0xff]
    %v239 = vld [vmem:[#allocation2 + $0x80] sm:$0xff]
    %v240 = vld [vmem:[#allocation2 + $0x88] sm:$0xff]
    %v241 = vld [vmem:[#allocation2 + $0x90] sm:$0xff]
    %v242 = vld [vmem:[#allocation2 + $0x98] sm:$0xff]
    %v243 = vld [vmem:[#allocation2 + $0xa0] sm:$0xff]
    %v244 = vld [vmem:[#allocation2 + $0xa8] sm:$0xff]
    %v245 = vld [vmem:[#allocation2 + $0xb0] sm:$0xff]
    %v246 = vld [vmem:[#allocation2 + $0xb8] sm:$0xff]
    %v247 = vld [vmem:[#allocation2 + $0xc0] sm:$0xff]
    %v248 = vld [vmem:[#allocation2 + $0xc8] sm:$0xff]
    %v249 = vld [vmem:[#allocation2 + $0xd0] sm:$0xff]
    %v250 = vld [vmem:[#allocation2 + $0xd8] sm:$0xff]
    %v251 = vld [vmem:[#allocation2 + $0xe0] sm:$0xff]
    %v252 = vld [vmem:[#allocation2 + $0xe8] sm:$0xff]
    %v253 = vld [vmem:[#allocation2 + $0xf0] sm:$0xff]
    %v254 = vld [vmem:[#allocation2 + $0xf8] sm:$0xff]
    %v255 = vld [vmem:[%s4] sm:$0xf]
    %v257 = vlaneseq
    %v258 = vshrl.u32 %v257, 7
    %v259 = vsub.s32 0, %v258
    %v260 = vrot.slane %v255, %v259
    %v261 = vlaneseq
    %v262 = vshrl.u32 %v261, 7
    %v263 = vsub.s32 1, %v262
    %v264 = vrot.slane %v255, %v263
    %v265 = vlaneseq
    %v266 = vshrl.u32 %v265, 7
    %v267 = vsub.s32 2, %v266
    %v268 = vrot.slane %v255, %v267
    %v269 = vlaneseq
    %v270 = vshrl.u32 %v269, 7
    %v271 = vsub.s32 3, %v270
    %v272 = vrot.slane %v255, %v271
    %v309 = vunpack.c.l.b16 %v223
    %v310 = vunpack.c.h.b16 %v223
    %v311 = vunpack.c.l.b16 %v224
    %v312 = vunpack.c.h.b16 %v224
    %v313 = vunpack.c.l.b16 %v225
    %v314 = vunpack.c.h.b16 %v225
    %v315 = vunpack.c.l.b16 %v226
    %v316 = vunpack.c.h.b16 %v226
    %v317 = vunpack.c.l.b16 %v227
    %v318 = vunpack.c.h.b16 %v227
    %v319 = vunpack.c.l.b16 %v228
    %v320 = vunpack.c.h.b16 %v228
    %v321 = vunpack.c.l.b16 %v229
    %v322 = vunpack.c.h.b16 %v229
    %v323 = vunpack.c.l.b16 %v230
    %v324 = vunpack.c.h.b16 %v230
    %v325 = vunpack.c.l.b16 %v231
    %v326 = vunpack.c.h.b16 %v231
    %v327 = vunpack.c.l.b16 %v232
    %v328 = vunpack.c.h.b16 %v232
    %v329 = vunpack.c.l.b16 %v233
    %v330 = vunpack.c.h.b16 %v233
    %v331 = vunpack.c.l.b16 %v234
    %v332 = vunpack.c.h.b16 %v234
    %v333 = vunpack.c.l.b16 %v235
    %v334 = vunpack.c.h.b16 %v235
    %v335 = vunpack.c.l.b16 %v236
    %v336 = vunpack.c.h.b16 %v236
    %v337 = vunpack.c.l.b16 %v237
    %v338 = vunpack.c.h.b16 %v237
    %v339 = vunpack.c.l.b16 %v238
    %v340 = vunpack.c.h.b16 %v238
    %v341 = vunpack.c.l.b16 %v239
    %v342 = vunpack.c.h.b16 %v239
    %v343 = vunpack.c.l.b16 %v240
    %v344 = vunpack.c.h.b16 %v240
    %v345 = vunpack.c.l.b16 %v241
    %v346 = vunpack.c.h.b16 %v241
    %v347 = vunpack.c.l.b16 %v242
    %v348 = vunpack.c.h.b16 %v242
    %v349 = vunpack.c.l.b16 %v243
    %v350 = vunpack.c.h.b16 %v243
    %v351 = vunpack.c.l.b16 %v244
    %v352 = vunpack.c.h.b16 %v244
    %v353 = vunpack.c.l.b16 %v245
    %v354 = vunpack.c.h.b16 %v245
    %v355 = vunpack.c.l.b16 %v246
    %v356 = vunpack.c.h.b16 %v246
    %v357 = vunpack.c.l.b16 %v247
    %v358 = vunpack.c.h.b16 %v247
    %v359 = vunpack.c.l.b16 %v248
    %v360 = vunpack.c.h.b16 %v248
    %v361 = vunpack.c.l.b16 %v249
    %v362 = vunpack.c.h.b16 %v249
    %v363 = vunpack.c.l.b16 %v250
    %v364 = vunpack.c.h.b16 %v250
    %v365 = vunpack.c.l.b16 %v251
    %v366 = vunpack.c.h.b16 %v251
    %v367 = vunpack.c.l.b16 %v252
    %v368 = vunpack.c.h.b16 %v252
    %v369 = vunpack.c.l.b16 %v253
    %v370 = vunpack.c.h.b16 %v253
    %v371 = vunpack.c.l.b16 %v254
    %v372 = vunpack.c.h.b16 %v254
    %v373 = vpack.c.b16 %v313, %v309
    %v374 = vpack.c.b16 %v314, %v310
    %v375 = vpack.c.b16 %v315, %v311
    %v376 = vpack.c.b16 %v316, %v312
    %v377 = vpack.c.b16 %v321, %v317
    %v378 = vpack.c.b16 %v322, %v318
    %v379 = vpack.c.b16 %v323, %v319
    %v380 = vpack.c.b16 %v324, %v320
    %v381 = vpack.c.b16 %v329, %v325
    %v382 = vpack.c.b16 %v330, %v326
    %v383 = vpack.c.b16 %v331, %v327
    %v384 = vpack.c.b16 %v332, %v328
    %v385 = vpack.c.b16 %v337, %v333
    %v386 = vpack.c.b16 %v338, %v334
    %v387 = vpack.c.b16 %v339, %v335
    %v388 = vpack.c.b16 %v340, %v336
    %v389 = vpack.c.b16 %v345, %v341
    %v390 = vpack.c.b16 %v346, %v342
    %v391 = vpack.c.b16 %v347, %v343
    %v392 = vpack.c.b16 %v348, %v344
    %v393 = vpack.c.b16 %v353, %v349
    %v394 = vpack.c.b16 %v354, %v350
    %v395 = vpack.c.b16 %v355, %v351
    %v396 = vpack.c.b16 %v356, %v352
    %v397 = vpack.c.b16 %v361, %v357
    %v398 = vpack.c.b16 %v362, %v358
    %v399 = vpack.c.b16 %v363, %v359
    %v400 = vpack.c.b16 %v364, %v360
    %v401 = vpack.c.b16 %v369, %v365
    %v402 = vpack.c.b16 %v370, %v366
    %v403 = vpack.c.b16 %v371, %v367
    %v404 = vpack.c.b16 %v372, %v368
    %437 = vmatprep.subr.bf16.mxu0 %v402
    %438 = vmatpush1.bf16.msra.mxu0 %v401
    %439 = vmatprep.subr.bf16.mxu0 %v398
    %440 = vmatpush1.bf16.msra.mxu0 %v397
    %441 = vmatprep.subr.bf16.mxu0 %v394
    %442 = vmatpush1.bf16.msra.mxu0 %v393
    %443 = vmatprep.subr.bf16.mxu0 %v390
    %444 = vmatpush1.bf16.msra.mxu0 %v389
    %445 = vmatprep.subr.bf16.mxu0 %v386
    %446 = vmatpush1.bf16.msra.mxu0 %v385
    %447 = vmatprep.subr.bf16.mxu0 %v382
    %448 = vmatpush1.bf16.msra.mxu0 %v381
    %449 = vmatprep.subr.bf16.mxu0 %v378
    %450 = vmatpush1.bf16.msra.mxu0 %v377
    %451 = vmatprep.subr.bf16.mxu0 %v374
    %452 = vmatpush1.bf16.msra.mxu0 %v373
    %453 = vmatprep.subr.bf16.mxu0 0
    %454 = vmatpush2.bf16.msra.mxu0 0
    %455 = vmatprep.subr.bf16.mxu0 0
    %456 = vmatpush2.bf16.msra.mxu0 0
    %457 = vmatprep.subr.bf16.mxu0 0
    %458 = vmatpush2.bf16.msra.mxu0 0
    %459 = vmatprep.subr.bf16.mxu0 0
    %460 = vmatpush2.bf16.msra.mxu0 0
    %461 = vmatprep.subr.bf16.mxu0 0
    %462 = vmatpush2.bf16.msra.mxu0 0
    %463 = vmatprep.subr.bf16.mxu0 0
    %464 = vmatpush2.bf16.msra.mxu0 0
    %465 = vmatprep.subr.bf16.mxu0 0
    %466 = vmatpush2.bf16.msra.mxu0 0
    %467 = vmatprep.subr.bf16.mxu0 0
    %468 = vmatpush2.bf16.msra.mxu0 0
    %469 = vmatprep.mubr.bf16.mxu0 0
    %470 = vmatmul.mubr.bf16.gmra.mxu0 %v222
    %v471 = vpop.f32.mrf.mxu0
    %v472 = vadd.f32 %v260, %v471
    %v473 = vpop.f32.mrf.mxu0
    %v474 = vadd.f32 %v264, %v473
    %v475 = vpop.f32.mrf.mxu0
    %v476 = vpop.f32.mrf.mxu0
    %477 = vdwg.mxu0
    %478 = vmatprep.subr.bf16.mxu0 %v404
    %479 = vmatpush1.bf16.msra.mxu0 %v403
    %480 = vmatprep.subr.bf16.mxu0 %v400
    %481 = vmatpush1.bf16.msra.mxu0 %v399
    %482 = vmatprep.subr.bf16.mxu0 %v396
    %483 = vmatpush1.bf16.msra.mxu0 %v395
    %484 = vmatprep.subr.bf16.mxu0 %v392
    %485 = vmatpush1.bf16.msra.mxu0 %v391
    %486 = vmatprep.subr.bf16.mxu0 %v388
    %487 = vmatpush1.bf16.msra.mxu0 %v387
    %488 = vmatprep.subr.bf16.mxu0 %v384
    %489 = vmatpush1.bf16.msra.mxu0 %v383
    %490 = vmatprep.subr.bf16.mxu0 %v380
    %491 = vmatpush1.bf16.msra.mxu0 %v379
    %492 = vmatprep.subr.bf16.mxu0 %v376
    %493 = vmatpush1.bf16.msra.mxu0 %v375
    %494 = vmatprep.subr.bf16.mxu0 0
    %495 = vmatpush2.bf16.msra.mxu0 0
    %496 = vmatprep.subr.bf16.mxu0 0
    %497 = vmatpush2.bf16.msra.mxu0 0
    %498 = vmatprep.subr.bf16.mxu0 0
    %499 = vmatpush2.bf16.msra.mxu0 0
    %500 = vmatprep.subr.bf16.mxu0 0
    %501 = vmatpush2.bf16.msra.mxu0 0
    %502 = vmatprep.subr.bf16.mxu0 0
    %503 = vmatpush2.bf16.msra.mxu0 0
    %504 = vmatprep.subr.bf16.mxu0 0
    %505 = vmatpush2.bf16.msra.mxu0 0
    %506 = vmatprep.subr.bf16.mxu0 0
    %507 = vmatpush2.bf16.msra.mxu0 0
    %508 = vmatprep.subr.bf16.mxu0 0
    %509 = vmatpush2.bf16.msra.mxu0 0
    %510 = vmatprep.mubr.bf16.mxu0 0
    %511 = vmatmul.mubr.bf16.gmra.mxu0 %v222
    %v512 = vpop.f32.mrf.mxu0
    %v513 = vadd.f32 %v268, %v512
    %v514 = vpop.f32.mrf.mxu0
    %v515 = vadd.f32 %v272, %v514
    %v516 = vpop.f32.mrf.mxu0
    %v517 = vpop.f32.mrf.mxu0
    %518 = vdwg.mxu0
    %v519 = vpack.c.bf16 %v472, %v472
    %v522 = vunpack.c.l.s4 1966171168
    %v523 = vunpack.c.0.s8 %v522
    %v524 = vlaneseq
    %v525 = vshrl.u32 %v524, 7
    %v526 = vsub.s32 %v523, %v525
    %v527 = vrot.slane %v519, %v526
    %v529 = vunpack.c.l.s4 1966171168
    %v530 = vunpack.c.0.s8 %v529
    %v531 = vlaneseq
    %v532 = vshrl.u32 %v531, 7
    %v533 = vsub.s32 %v530, %v532
    %v534 = vrot.slane %v527, %v533
    %v535 = vunpack.i.l.s16 %v534
    %v536 = vunpack.i.h.s16 %v534
    %v537 = vpack.i.b16 %v535, %v535
    %v538 = vpack.i.b16 %v536, %v536
    %v540 = vunpack.c.l.s4 286326784
    %v541 = vunpack.c.0.s8 %v540
    %v542 = vlaneseq
    %v543 = vshrl.u32 %v542, 7
    %v544 = vsub.s32 %v541, %v543
    %v545 = vrot.slane %v537, %v544
    %v547 = vunpack.c.l.s4 286326784
    %v548 = vunpack.c.0.s8 %v547
    %v549 = vlaneseq
    %v550 = vshrl.u32 %v549, 7
    %v551 = vsub.s32 %v548, %v550
    %v552 = vrot.slane %v538, %v551
    %vm555 = vcmask 1040384
    %vm556 = vsmask.f32 256
    %vm557 = vmand %vm555, %vm556
    %v558 = vld [vmem:[%s7] sm:$0x1]
    %v559 = vsel %vm557, %v545, %v558
    %560 = vst [vmem:[%s7] sm:$0x1] %v559
    %v561 = vld [vmem:[%s7 + $0xc] sm:$0x1]
    %v562 = vsel %vm557, %v552, %v561
    %563 = vst [vmem:[%s7 + $0xc] sm:$0x1] %v562
    %v564 = vpack.c.bf16 %v474, %v474
    %v567 = vunpack.c.l.s4 1966171168
    %v568 = vunpack.c.0.s8 %v567
    %v569 = vlaneseq
    %v570 = vshrl.u32 %v569, 7
    %v571 = vsub.s32 %v568, %v570
    %v572 = vrot.slane %v564, %v571
    %v574 = vunpack.c.l.s4 1966171168
    %v575 = vunpack.c.0.s8 %v574
    %v576 = vlaneseq
    %v577 = vshrl.u32 %v576, 7
    %v578 = vsub.s32 %v575, %v577
    %v579 = vrot.slane %v572, %v578
    %v580 = vunpack.i.l.s16 %v579
    %v581 = vunpack.i.h.s16 %v579
    %v582 = vpack.i.b16 %v580, %v580
    %v583 = vpack.i.b16 %v581, %v581
    %v585 = vunpack.c.l.s4 286326784
    %v586 = vunpack.c.0.s8 %v585
    %v587 = vlaneseq
    %v588 = vshrl.u32 %v587, 7
    %v589 = vsub.s32 %v586, %v588
    %v590 = vrot.slane %v582, %v589
    %v592 = vunpack.c.l.s4 286326784
    %v593 = vunpack.c.0.s8 %v592
    %v594 = vlaneseq
    %v595 = vshrl.u32 %v594, 7
    %v596 = vsub.s32 %v593, %v595
    %v597 = vrot.slane %v583, %v596
    %vm600 = vsmask.f32 7938
    %vm601 = vmand %vm555, %vm600
    %v602 = vld [vmem:[%s7] sm:$0x1]
    %v603 = vsel %vm601, %v590, %v602
    %604 = vst [vmem:[%s7] sm:$0x1] %v603
    %v605 = vld [vmem:[%s7 + $0xc] sm:$0x1]
    %v606 = vsel %vm601, %v597, %v605
    %607 = vst [vmem:[%s7 + $0xc] sm:$0x1] %v606
    %v608 = vpack.c.bf16 %v513, %v513
    %v611 = vunpack.c.l.s4 1966171168
    %v612 = vunpack.c.0.s8 %v611
    %v613 = vlaneseq
    %v614 = vshrl.u32 %v613, 7
    %v615 = vsub.s32 %v612, %v614
    %v616 = vrot.slane %v608, %v615
    %v618 = vunpack.c.l.s4 1966171168
    %v619 = vunpack.c.0.s8 %v618
    %v620 = vlaneseq
    %v621 = vshrl.u32 %v620, 7
    %v622 = vsub.s32 %v619, %v621
    %v623 = vrot.slane %v616, %v622
    %v624 = vunpack.i.l.s16 %v623
    %v625 = vunpack.i.h.s16 %v623
    %v626 = vpack.i.b16 %v624, %v624
    %v627 = vpack.i.b16 %v625, %v625
    %v629 = vunpack.c.l.s4 286326784
    %v630 = vunpack.c.0.s8 %v629
    %v631 = vlaneseq
    %v632 = vshrl.u32 %v631, 7
    %v633 = vsub.s32 %v630, %v632
    %v634 = vrot.slane %v626, %v633
    %v636 = vunpack.c.l.s4 286326784
    %v637 = vunpack.c.0.s8 %v636
    %v638 = vlaneseq
    %v639 = vshrl.u32 %v638, 7
    %v640 = vsub.s32 %v637, %v639
    %v641 = vrot.slane %v627, %v640
    %vm644 = vcmask 1041409
    %vm645 = vsmask.f32 1280
    %vm646 = vmand %vm644, %vm645
    %v647 = vld [vmem:[%s7] sm:$0x2]
    %v648 = vsel %vm646, %v634, %v647
    %649 = vst [vmem:[%s7] sm:$0x2] %v648
    %v650 = vld [vmem:[%s7 + $0xc] sm:$0x2]
    %v651 = vsel %vm646, %v641, %v650
    %652 = vst [vmem:[%s7 + $0xc] sm:$0x2] %v651
    %v653 = vpack.c.bf16 %v515, %v515
    %v656 = vunpack.c.l.s4 1966171168
    %v657 = vunpack.c.0.s8 %v656
    %v658 = vlaneseq
    %v659 = vshrl.u32 %v658, 7
    %v660 = vsub.s32 %v657, %v659
    %v661 = vrot.slane %v653, %v660
    %v663 = vunpack.c.l.s4 1966171168
    %v664 = vunpack.c.0.s8 %v663
    %v665 = vlaneseq
    %v666 = vshrl.u32 %v665, 7
    %v667 = vsub.s32 %v664, %v666
    %v668 = vrot.slane %v661, %v667
    %v669 = vunpack.i.l.s16 %v668
    %v670 = vunpack.i.h.s16 %v668
    %v671 = vpack.i.b16 %v669, %v669
    %v672 = vpack.i.b16 %v670, %v670
    %v674 = vunpack.c.l.s4 286326784
    %v675 = vunpack.c.0.s8 %v674
    %v676 = vlaneseq
    %v677 = vshrl.u32 %v676, 7
    %v678 = vsub.s32 %v675, %v677
    %v679 = vrot.slane %v671, %v678
    %v681 = vunpack.c.l.s4 286326784
    %v682 = vunpack.c.0.s8 %v681
    %v683 = vlaneseq
    %v684 = vshrl.u32 %v683, 7
    %v685 = vsub.s32 %v682, %v684
    %v686 = vrot.slane %v672, %v685
    %vm689 = vsmask.f32 7942
    %vm690 = vmand %vm644, %vm689
    %v691 = vld [vmem:[%s7] sm:$0x2]
    %v692 = vsel %vm690, %v679, %v691
    %693 = vst [vmem:[%s7] sm:$0x2] %v692
    %v694 = vld [vmem:[%s7 + $0xc] sm:$0x2]
    %v695 = vsel %vm690, %v686, %v694
    %696 = vst [vmem:[%s7 + $0xc] sm:$0x2] %v695
    %v697 = vld [vmem:[%s5] sm:$0xff]
    %v698 = vld [vmem:[%s5 + $0x8] sm:$0xff]
    %v699 = vld [vmem:[%s5 + $0x10] sm:$0xff]
    %v700 = vld [vmem:[%s5 + $0x18] sm:$0xff]
    %701 = vset.pattern.permute.xlu0 0
    %702 = vperm.xlu0 %701, %v697
    %v703 = vpop.permute.xlu0 %702
    %704 = vset.pattern.permute.xlu0 0
    %705 = vperm.xlu0 %704, %v698
    %v706 = vpop.permute.xlu0 %705
    %707 = vset.pattern.permute.xlu0 0
    %708 = vperm.xlu0 %707, %v699
    %v709 = vpop.permute.xlu0 %708
    %710 = vset.pattern.permute.xlu0 0
    %711 = vperm.xlu0 %710, %v700
    %v712 = vpop.permute.xlu0 %711
    %vm713 = vcmp.eq.s32.totalorder %v703, %v56
    %vm714 = vcmp.eq.s32.totalorder %v706, %v56
    %vm715 = vcmp.eq.s32.totalorder %v709, %v56
    %vm716 = vcmp.eq.s32.totalorder %v712, %v56
    %v717 = vsel %vm713, 1, 0
    %v718 = vsel %vm714, 1, 0
    %v719 = vsel %vm715, 1, 0
    %v720 = vsel %vm716, 1, 0
    %v721 = vcvt.s32.f32 %v717
    %v722 = vcvt.s32.f32 %v718
    %v723 = vcvt.s32.f32 %v719
    %v724 = vcvt.s32.f32 %v720
    %v725 = vpack.c.bf16 %v722, %v721
    %v726 = vpack.c.bf16 %v724, %v723
    %v727 = vld [vmem:[#allocation4] sm:$0xf]
    %v728 = vld [vmem:[#allocation4 + $0x4] sm:$0xf]
    %v729 = vld [vmem:[#allocation4 + $0x8] sm:$0xf]
    %v730 = vld [vmem:[#allocation4 + $0xc] sm:$0xf]
    %v731 = vld [vmem:[#allocation4 + $0x10] sm:$0xf]
    %v732 = vld [vmem:[#allocation4 + $0x14] sm:$0xf]
    %v733 = vld [vmem:[#allocation4 + $0x18] sm:$0xf]
    %v734 = vld [vmem:[#allocation4 + $0x1c] sm:$0xf]
    %v735 = vld [vmem:[#allocation4 + $0x20] sm:$0xf]
    %v736 = vld [vmem:[#allocation4 + $0x24] sm:$0xf]
    %v737 = vld [vmem:[#allocation4 + $0x28] sm:$0xf]
    %v738 = vld [vmem:[#allocation4 + $0x2c] sm:$0xf]
    %v739 = vld [vmem:[#allocation4 + $0x30] sm:$0xf]
    %v740 = vld [vmem:[#allocation4 + $0x34] sm:$0xf]
    %v741 = vld [vmem:[#allocation4 + $0x38] sm:$0xf]
    %v742 = vld [vmem:[#allocation4 + $0x3c] sm:$0xf]
    %v759 = vunpack.c.l.b16 %v727
    %v760 = vunpack.c.l.b16 %v728
    %v761 = vunpack.c.l.b16 %v729
    %v762 = vunpack.c.l.b16 %v730
    %v763 = vunpack.c.l.b16 %v731
    %v764 = vunpack.c.l.b16 %v732
    %v765 = vunpack.c.l.b16 %v733
    %v766 = vunpack.c.l.b16 %v734
    %v767 = vunpack.c.l.b16 %v735
    %v768 = vunpack.c.l.b16 %v736
    %v769 = vunpack.c.l.b16 %v737
    %v770 = vunpack.c.l.b16 %v738
    %v771 = vunpack.c.l.b16 %v739
    %v772 = vunpack.c.l.b16 %v740
    %v773 = vunpack.c.l.b16 %v741
    %v774 = vunpack.c.l.b16 %v742
    %v775 = vpack.c.b16 %v760, %v759
    %v776 = vpack.c.b16 %v762, %v761
    %v777 = vpack.c.b16 %v764, %v763
    %v778 = vpack.c.b16 %v766, %v765
    %v779 = vpack.c.b16 %v768, %v767
    %v780 = vpack.c.b16 %v770, %v769
    %v781 = vpack.c.b16 %v772, %v771
    %v782 = vpack.c.b16 %v774, %v773
    %791 = vmatprep.subr.bf16.mxu0 0
    %792 = vmatpush1.bf16.msra.mxu0 %v782
    %793 = vmatprep.subr.bf16.mxu0 0
    %794 = vmatpush1.bf16.msra.mxu0 %v781
    %795 = vmatprep.subr.bf16.mxu0 0
    %796 = vmatpush1.bf16.msra.mxu0 %v780
    %797 = vmatprep.subr.bf16.mxu0 0
    %798 = vmatpush1.bf16.msra.mxu0 %v779
    %799 = vmatprep.subr.bf16.mxu0 0
    %800 = vmatpush1.bf16.msra.mxu0 %v778
    %801 = vmatprep.subr.bf16.mxu0 0
    %802 = vmatpush1.bf16.msra.mxu0 %v777
    %803 = vmatprep.subr.bf16.mxu0 0
    %804 = vmatpush1.bf16.msra.mxu0 %v776
    %805 = vmatprep.subr.bf16.mxu0 0
    %806 = vmatpush1.bf16.msra.mxu0 %v775
    %807 = vmatprep.subr.bf16.mxu0 0
    %808 = vmatpush2.bf16.msra.mxu0 0
    %809 = vmatprep.subr.bf16.mxu0 0
    %810 = vmatpush2.bf16.msra.mxu0 0
    %811 = vmatprep.subr.bf16.mxu0 0
    %812 = vmatpush2.bf16.msra.mxu0 0
    %813 = vmatprep.subr.bf16.mxu0 0
    %814 = vmatpush2.bf16.msra.mxu0 0
    %815 = vmatprep.subr.bf16.mxu0 0
    %816 = vmatpush2.bf16.msra.mxu0 0
    %817 = vmatprep.subr.bf16.mxu0 0
    %818 = vmatpush2.bf16.msra.mxu0 0
    %819 = vmatprep.subr.bf16.mxu0 0
    %820 = vmatpush2.bf16.msra.mxu0 0
    %821 = vmatprep.subr.bf16.mxu0 0
    %822 = vmatpush2.bf16.msra.mxu0 0
    %823 = vmatprep.mubr.bf16.mxu0 0
    %824 = vmatmul.mubr.bf16.gmra.mxu0 %v725
    %v825 = vpop.f32.mrf.mxu0
    %v826 = vadd.f32 0.0, %v825
    %v827 = vpop.f32.mrf.mxu0
    %v828 = vpop.f32.mrf.mxu0
    %v829 = vadd.f32 0.0, %v828
    %v830 = vpop.f32.mrf.mxu0
    %831 = vmatprep.mubr.bf16.mxu0 0
    %832 = vmatmul.mubr.bf16.gmra.mxu0 %v726
    %v833 = vpop.f32.mrf.mxu0
    %v834 = vadd.f32 0.0, %v833
    %v835 = vpop.f32.mrf.mxu0
    %v836 = vpop.f32.mrf.mxu0
    %v837 = vadd.f32 0.0, %v836
    %v838 = vpop.f32.mrf.mxu0
    %839 = vdwg.mxu0
    %v840 = vpack.c.bf16 %v829, %v826
    %v841 = vpack.c.bf16 %v837, %v834
    %v844 = vunpack.c.l.b16 %v840
    %v845 = vunpack.c.h.b16 %v840
    %v846 = vunpack.c.l.b16 %v841
    %v847 = vunpack.c.h.b16 %v841
    %v848 = vpack.c.b16 %v844, %v844
    %v849 = vpack.c.b16 %v845, %v845
    %v850 = vpack.c.b16 %v846, %v846
    %v851 = vpack.c.b16 %v847, %v847
    %vm852 = vcmask 1041408
    %vm853 = vcmask 1045508
    %vm854 = vmor %vm852, %vm853
    %v855 = vrot.slane %v848, 6
    %v856 = vrot.slane %v855, 4
    %v857 = vrot.slane %v849, 6
    %v858 = vsel %vm854, %v856, %v857
    %v859 = vrot.slane %v857, 4
    %v860 = vrot.slane %v850, 6
    %v861 = vrot.slane %v860, 4
    %v862 = vrot.slane %v851, 6
    %v863 = vsel %vm854, %v861, %v862
    %v864 = vrot.slane %v862, 4
    %871 = vst [vmem:[%s7] sm:$0xc] %v855
    %872 = vst [vmem:[%s7 + $0x4] sm:$0xf] %v858
    %873 = vst [vmem:[%s7 + $0x8] sm:$0x3] %v859
    %874 = vst [vmem:[%s7 + $0xc] sm:$0xc] %v860
    %875 = vst [vmem:[%s7 + $0x10] sm:$0xf] %v863
    %876 = vst [vmem:[%s7 + $0x14] sm:$0x3] %v864
    // Predicated region
    $region38: #{full_multimodal_forward.1} parent=1 // pred_check
      _
    $region39: #{full_multimodal_forward.1} parent=1 // pred_check_branch
      %878 = sbr.rel (0) target = $region41
    $region40: #{full_multimodal_forward.1} parent=1 // pred_region
      _
    $region41: #{full_multimodal_forward.1} parent=1 // pred_fallthru
      _
    // Predicated region
    $region42: #{full_multimodal_forward.1} parent=1 // pred_check
      _
    $region43: #{full_multimodal_forward.1} parent=1 // pred_check_branch
      %880 = sbr.rel (0) target = $region45
    $region44: #{full_multimodal_forward.1} parent=1 // pred_region
      _
    $region45: #{full_multimodal_forward.1} parent=1 // pred_fallthru
      _
    %881 = vsyncpa [#allocation3], 1
    %882 = vsyncpa [#allocation5], 1

</llo_original>
